<compile_context>
chip_gen: v7x
topology: tpu7x:2x2x1
jax: 0.10.0
libtpu: 0.0.40
codegen_flags: <defaults>
</compile_context>

<pallas_src>
import functools

import jax
import jax.numpy as jnp
from jax.experimental import pallas as pl
from jax.experimental.pallas import tpu as pltpu


def _round_up(a: int, b: int) -> int:
    return (a + b - 1) // b * b


def _projection_kernel(x_ref, w_ref, b_ref, o_ref, m_ref, l_ref, *cache,
                       nv, tn, v_total, mask_last, use_cache):
    """Row tile i = program_id(0); vocab-sweep step j = program_id(1) in [0, 2*nv)."""
    j = pl.program_id(1)
    cache_ref = cache[0] if use_cache else None

    @pl.when(j == 0)
    def _init():
        m_ref[...] = jnp.full_like(m_ref, -jnp.inf)
        l_ref[...] = jnp.zeros_like(l_ref)

    def _logits(tile_idx):
        # Operands stay in their (possibly bf16) dtype -> full-rate MXU; accumulate in f32.
        acc = jnp.dot(x_ref[...], w_ref[...], preferred_element_type=jnp.float32)
        logits = acc + b_ref[...].astype(jnp.float32)
        if mask_last:
            # Neutralize the ragged last vocab tile: columns >= V read unpadded HBM
            # garbage, force them to -1e30 so exp() contributes 0 to the log-sum-exp.
            col = tile_idx * tn + jax.lax.broadcasted_iota(jnp.int32, logits.shape, 1)
            logits = jnp.where(col < v_total, logits, -1e30)
        return logits

    @pl.when(j < nv)
    def _pass1():
        logits = _logits(j)                                          # (tm, tn) f32
        if use_cache:
            cache_ref[j] = logits.astype(cache_ref.dtype)
        m_prev = m_ref[...]                                          # (tm, 1)
        m_new = jnp.maximum(m_prev, jnp.max(logits, axis=-1, keepdims=True))
        l_ref[...] = (l_ref[...] * jnp.exp(m_prev - m_new)
                      + jnp.sum(jnp.exp(logits - m_new), axis=-1, keepdims=True))
        m_ref[...] = m_new

    @pl.when(j == nv)
    def _finalize_lse():
        # Fold log(sum-exp) into the running max once; m_ref now holds the row lse.
        m_ref[...] = m_ref[...] + jnp.log(l_ref[...])

    @pl.when(j >= nv)
    def _pass2():
        jj = j - nv
        if use_cache:
            logits = cache_ref[jj].astype(jnp.float32)   # no matmul, no 2nd weight sweep
        else:
            logits = _logits(jj)                         # recompute (weights re-streamed)
        o_ref[...] = (logits - m_ref[...]).astype(o_ref.dtype)


@functools.partial(
    jax.jit,
    static_argnames=("tm", "tn", "out_dtype", "compute_dtype", "use_logits_cache"))
def projection_layer(x, w, b, *, tm=None, tn=None, out_dtype=None,
                     compute_dtype=None, use_logits_cache=None):
    """ProjectionLayer forward: log_softmax(x @ w + b, axis=-1).

    x: (B, S, D); w: (D, V) (transposed vs. the torch Linear weight); b: (V,).
    Returns (B, S, V) log-probabilities in `out_dtype` (default: x.dtype).

    compute_dtype: e.g. jnp.bfloat16 to halve the weight HBM stream (stats stay f32).
    use_logits_cache: force/disable the VMEM logits cache (None = auto by VMEM budget).
    """
    B, S, D = x.shape
    Dw, V = w.shape
    assert D == Dw, "weight must be (d_model, vocab)"
    M = B * S
    out_dtype = out_dtype or x.dtype

    cdt = jnp.dtype(compute_dtype) if compute_dtype is not None else jnp.dtype(x.dtype)
    x2 = x.reshape(M, D).astype(cdt)          # reshape is free; cast only if requested
    w_c = w.astype(cdt)
    b2 = b.astype(jnp.float32).reshape(1, V)  # tiny; keep bias math in f32

    # --- per-generation VMEM budget (v7x: 64 MiB; v5e/v6e: 128 MiB) -----------------
    try:
        vmem_cap = int(pltpu.get_tpu_info().vmem_capacity_bytes)
    except Exception:  # fall back to the smallest (v7x) capacity
        vmem_cap = 64 << 20
    budget = int(vmem_cap * 0.65)

    # --- tile sizes ------------------------------------------------------------------
    tm_auto = tm is None
    tn_auto = tn is None
    if tn_auto:
        tn = 2048                      # fewer grid steps + larger weight DMAs
    if tm_auto:
        tm = 512                       # tm amortizes the (re-)streamed weight bytes
        # Keep >=2 row tiles when M allows so the 'parallel' axis can feed both v7x
        # TensorCores (never below ~256 rows: weight amortization dominates).
        if 512 <= M < 2 * tm:
            tm = _round_up((M + 1) // 2, 8)
    # Legalize: a block dim must be a multiple of (8, 128) or span the full array dim.
    tm = M if tm >= M else _round_up(tm, 8)
    tn = V if tn >= V else _round_up(tn, 128)

    bx = jnp.dtype(cdt).itemsize
    bo = jnp.dtype(out_dtype).itemsize
    cache_dt = jnp.bfloat16 if cdt == jnp.bfloat16 else jnp.float32
    bc = jnp.dtype(cache_dt).itemsize

    def _est(tm_, tn_):
        # Double-buffered blocks + f32 logits/exp temporaries + stats scratch.
        return (2 * (tm_ * D * bx + D * tn_ * bx + tn_ * 4)
                + 2 * tm_ * tn_ * bo
                + 3 * tm_ * tn_ * 4
                + 4 * tm_ * 4)

    if tn_auto:
        while tn < V and tn > 512 and _est(tm, tn) > budget:
            tn = max(512, tn // 2)
    if tm_auto:
        while tm < M and tm > 128 and _est(tm, tn) > budget:
            tm = max(128, _round_up(tm // 2, 8))

    nm = pl.cdiv(M, tm)
    nv = pl.cdiv(V, tn)
    mask_last = (V % tn) != 0

    # Logits cache: eliminates the second weight sweep when (nv, tm, tn) fits the budget.
    cache_bytes = nv * tm * tn * bc
    if use_logits_cache is None:
        use_logits_cache = (_est(tm, tn) + cache_bytes) <= budget
    use_logits_cache = bool(use_logits_cache)

    total_est = _est(tm, tn) + (cache_bytes if use_logits_cache else 0)
    vmem_limit = int(min(max(total_est + (4 << 20), 32 << 20), int(vmem_cap * 0.9)))

    kernel = functools.partial(_projection_kernel, nv=nv, tn=tn, v_total=V,
                               mask_last=mask_last, use_cache=use_logits_cache)

    if use_logits_cache:
        # Pass 2 never advances the weight/bias block -> W streamed once per row tile.
        wb_idx = lambda i, j: (0, jnp.minimum(j, nv - 1))
    else:
        wb_idx = lambda i, j: (0, jnp.where(j < nv, j, j - nv))

    scratch = [pltpu.VMEM((tm, 1), jnp.float32),    # running max m (later: lse)
               pltpu.VMEM((tm, 1), jnp.float32)]    # running sum-exp l
    if use_logits_cache:
        scratch.append(pltpu.VMEM((nv, tm, tn), cache_dt))

    out2 = pl.pallas_call(
        kernel,
        out_shape=jax.ShapeDtypeStruct((M, V), out_dtype),   # exact shape: no pad/slice
        grid_spec=pltpu.PrefetchScalarGridSpec(
            num_scalar_prefetch=0,
            grid=(nm, 2 * nv),                      # rows (parallel) x two vocab sweeps
            in_specs=[
                pl.BlockSpec((tm, D), lambda i, j: (i, 0)),   # x row tile, resident over j
                pl.BlockSpec((D, tn), wb_idx),                # weight vocab tile
                pl.BlockSpec((1, tn), wb_idx),                # bias vocab tile
            ],
            out_specs=pl.BlockSpec(
                (tm, tn), lambda i, j: (i, jnp.maximum(j - nv, 0))  # written in pass 2
            ),
            scratch_shapes=scratch,
        ),
        compiler_params=pltpu.CompilerParams(
            dimension_semantics=("parallel", "arbitrary"),
            vmem_limit_bytes=vmem_limit,
        ),
    )(x2, w_c, b2)

    return out2.reshape(B, S, V)


if __name__ == "__main__":
    # ProjectionLayer(d_model, vocab_size): Linear(d_model -> vocab) + log_softmax(dim=-1)
    # Shapes chosen to exercise ragged row tiling, vocab tiling and in-kernel masking.
    batch, seq, d_model, vocab = 2, 7, 32, 500

    key = jax.random.PRNGKey(0)
    kx, kw, kb = jax.random.split(key, 3)

    x = jax.random.normal(kx, (batch, seq, d_model), dtype=jnp.float32)
    # PyTorch stores Linear weight as (vocab, d_model); we keep the transposed
    # (d_model, vocab) layout used directly in x @ W.
    w = jax.random.normal(kw, (d_model, vocab), dtype=jnp.float32) * (1.0 / d_model ** 0.5)
    b = jax.random.normal(kb, (vocab,), dtype=jnp.float32) * 0.01

    ref = jax.nn.log_softmax(jnp.einsum("bsd,dv->bsv", x, w) + b, axis=-1)

    # 1) default config: full-extent tiles (nm=nv=1), f32, logits cache active.
    out = jax.block_until_ready(projection_layer(x, w, b))
    assert out.shape == (batch, seq, vocab)
    assert jnp.allclose(out, ref, atol=1e-4, rtol=1e-4), "default config mismatch"

    # 2) multi-tile grid: ragged row tile + masked ragged vocab tile, cache path.
    out = jax.block_until_ready(projection_layer(x, w, b, tm=8, tn=128))
    assert jnp.allclose(out, ref, atol=1e-4, rtol=1e-4), "tiled (cache) mismatch"

    # 3) same grid, recompute path (no logits cache -> second weight sweep).
    out = jax.block_until_ready(
        projection_layer(x, w, b, tm=8, tn=128, use_logits_cache=False))
    assert jnp.allclose(out, ref, atol=1e-4, rtol=1e-4), "tiled (recompute) mismatch"

    # 4) bf16 compute fast path (halved weight HBM stream; stats stay f32).
    out = jax.block_until_ready(
        projection_layer(x, w, b, tm=8, tn=128, compute_dtype=jnp.bfloat16))
    assert jnp.allclose(out, ref, atol=1e-1, rtol=1e-2), "bf16 compute mismatch"

    print("KERNEL_OK")
</pallas_src>

<mosaic_0001>
module attributes {stable_mosaic.version = 11 : i64} {
  func.func @_projection_kernel(%arg0: i32, %arg1: i32, %arg2: memref<14x32xf32, #tpu.memory_space<vmem>>, %arg3: memref<32x500xf32, #tpu.memory_space<vmem>>, %arg4: memref<1x500xf32, #tpu.memory_space<vmem>>, %arg5: memref<14x500xf32, #tpu.memory_space<vmem>>, %arg6: memref<14x1xf32, #tpu.memory_space<vmem>>, %arg7: memref<14x1xf32, #tpu.memory_space<vmem>>, %arg8: memref<1x14x500xf32, #tpu.memory_space<vmem>>) attributes {dimension_semantics = [#tpu.dimension_semantics<parallel>, #tpu.dimension_semantics<arbitrary>], iteration_bounds = array<i64: 1, 2>, scalar_prefetch = 0 : i64, scratch_operands = 3 : i64, tpu.core_type = #tpu.core_type<tc>, window_params = [{transform_indices = @transform_0, window_bounds = array<i64: 14, 32>}, {transform_indices = @transform_1, window_bounds = array<i64: 32, 500>}, {transform_indices = @transform_2, window_bounds = array<i64: 1, 500>}, {transform_indices = @transform_3, window_bounds = array<i64: 14, 500>}]} {
    %c0_i32 = arith.constant 0 : i32
    %0 = arith.cmpi eq, %arg1, %c0_i32 : i32
    %1 = arith.extui %0 : i1 to i32
    %c0_i32_0 = arith.constant 0 : i32
    %2 = arith.cmpi ne, %1, %c0_i32_0 : i32
    scf.if %2 {
      %cst = arith.constant 0xFF800000 : f32
      %12 = vector.broadcast %cst : f32 to vector<14x1xf32>
      %c0 = arith.constant 0 : index
      %c0_6 = arith.constant 0 : index
      %13 = vector.load %arg6[%c0, %c0_6] : memref<14x1xf32, #tpu.memory_space<vmem>>, vector<14x1xf32>
      tpu.vector_store %arg6[%c0, %c0_6], %12 {strides = array<i32>} : memref<14x1xf32, #tpu.memory_space<vmem>>, vector<14x1xf32>,
      %cst_7 = arith.constant 0.000000e+00 : f32
      %14 = vector.broadcast %cst_7 : f32 to vector<14x1xf32>
      %c0_8 = arith.constant 0 : index
      %c0_9 = arith.constant 0 : index
      %15 = vector.load %arg7[%c0_8, %c0_9] : memref<14x1xf32, #tpu.memory_space<vmem>>, vector<14x1xf32>
      tpu.vector_store %arg7[%c0_8, %c0_9], %14 {strides = array<i32>} : memref<14x1xf32, #tpu.memory_space<vmem>>, vector<14x1xf32>,
    } else {
    }
    %c1_i32 = arith.constant 1 : i32
    %3 = arith.cmpi slt, %arg1, %c1_i32 : i32
    %4 = arith.extui %3 : i1 to i32
    %c0_i32_1 = arith.constant 0 : i32
    %5 = arith.cmpi ne, %4, %c0_i32_1 : i32
    scf.if %5 {
      %c0 = arith.constant 0 : index
      %c0_6 = arith.constant 0 : index
      %12 = vector.load %arg2[%c0, %c0_6] : memref<14x32xf32, #tpu.memory_space<vmem>>, vector<14x32xf32>
      %c0_7 = arith.constant 0 : index
      %c0_8 = arith.constant 0 : index
      %13 = vector.load %arg3[%c0_7, %c0_8] : memref<32x500xf32, #tpu.memory_space<vmem>>, vector<32x500xf32>
      %cst = arith.constant dense<0.000000e+00> : vector<14x500xf32>
      %14 = tpu.matmul %12, %13, %cst {dimension_numbers = #tpu.dot_dimension_numbers<[1], [0], [0], [1], [0, 0, 1, 1], [], []>} : vector<14x32xf32>, vector<32x500xf32>, vector<14x500xf32> -> vector<14x500xf32>
      %c0_9 = arith.constant 0 : index
      %c0_10 = arith.constant 0 : index
      %15 = vector.load %arg4[%c0_9, %c0_10] : memref<1x500xf32, #tpu.memory_space<vmem>>, vector<1x500xf32>
      %16 = vector.broadcast %15 : vector<1x500xf32> to vector<14x500xf32>
      %17 = arith.addf %14, %16 : vector<14x500xf32>
      %18 = arith.index_cast %arg1 : i32 to index
      %c0_11 = arith.constant 0 : index
      %c0_12 = arith.constant 0 : index
      %19 = vector.load %arg8[%18, %c0_11, %c0_12] : memref<1x14x500xf32, #tpu.memory_space<vmem>>, vector<1x14x500xf32>
      %20 = vector.shape_cast %19 : vector<1x14x500xf32> to vector<14x500xf32>
      %21 = vector.shape_cast %17 : vector<14x500xf32> to vector<1x14x500xf32>
      tpu.vector_store %arg8[%18, %c0_11, %c0_12], %21 {strides = array<i32>} : memref<1x14x500xf32, #tpu.memory_space<vmem>>, vector<1x14x500xf32>,
      %c0_13 = arith.constant 0 : index
      %c0_14 = arith.constant 0 : index
      %22 = vector.load %arg6[%c0_13, %c0_14] : memref<14x1xf32, #tpu.memory_space<vmem>>, vector<14x1xf32>
      %cst_15 = arith.constant dense<0xFF800000> : vector<14xf32>
      %23 = vector.multi_reduction <maximumf>, %17, %cst_15 [1] : vector<14x500xf32> to vector<14xf32>
      %24 = vector.shape_cast %23 : vector<14xf32> to vector<14x1xf32>
      %25 = arith.maximumf %22, %24 : vector<14x1xf32>
      %c0_16 = arith.constant 0 : index
      %c0_17 = arith.constant 0 : index
      %26 = vector.load %arg7[%c0_16, %c0_17] : memref<14x1xf32, #tpu.memory_space<vmem>>, vector<14x1xf32>
      %27 = arith.subf %22, %25 : vector<14x1xf32>
      %28 = math.exp %27 : vector<14x1xf32>
      %29 = arith.mulf %26, %28 : vector<14x1xf32>
      %30 = vector.broadcast %25 : vector<14x1xf32> to vector<14x500xf32>
      %31 = arith.subf %17, %30 : vector<14x500xf32>
      %32 = math.exp %31 : vector<14x500xf32>
      %cst_18 = arith.constant dense<0.000000e+00> : vector<14xf32>
      %33 = vector.multi_reduction <add>, %32, %cst_18 [1] : vector<14x500xf32> to vector<14xf32>
      %34 = vector.shape_cast %33 : vector<14xf32> to vector<14x1xf32>
      %35 = arith.addf %29, %34 : vector<14x1xf32>
      %c0_19 = arith.constant 0 : index
      %c0_20 = arith.constant 0 : index
      %36 = vector.load %arg7[%c0_19, %c0_20] : memref<14x1xf32, #tpu.memory_space<vmem>>, vector<14x1xf32>
      tpu.vector_store %arg7[%c0_19, %c0_20], %35 {strides = array<i32>} : memref<14x1xf32, #tpu.memory_space<vmem>>, vector<14x1xf32>,
      %c0_21 = arith.constant 0 : index
      %c0_22 = arith.constant 0 : index
      %37 = vector.load %arg6[%c0_21, %c0_22] : memref<14x1xf32, #tpu.memory_space<vmem>>, vector<14x1xf32>
      tpu.vector_store %arg6[%c0_21, %c0_22], %25 {strides = array<i32>} : memref<14x1xf32, #tpu.memory_space<vmem>>, vector<14x1xf32>,
    } else {
    }
    %c1_i32_2 = arith.constant 1 : i32
    %6 = arith.cmpi eq, %arg1, %c1_i32_2 : i32
    %7 = arith.extui %6 : i1 to i32
    %c0_i32_3 = arith.constant 0 : i32
    %8 = arith.cmpi ne, %7, %c0_i32_3 : i32
    scf.if %8 {
      %c0 = arith.constant 0 : index
      %c0_6 = arith.constant 0 : index
      %12 = vector.load %arg6[%c0, %c0_6] : memref<14x1xf32, #tpu.memory_space<vmem>>, vector<14x1xf32>
      %c0_7 = arith.constant 0 : index
      %c0_8 = arith.constant 0 : index
      %13 = vector.load %arg7[%c0_7, %c0_8] : memref<14x1xf32, #tpu.memory_space<vmem>>, vector<14x1xf32>
      %14 = math.log %13 : vector<14x1xf32>
      %15 = arith.addf %12, %14 : vector<14x1xf32>
      %c0_9 = arith.constant 0 : index
      %c0_10 = arith.constant 0 : index
      %16 = vector.load %arg6[%c0_9, %c0_10] : memref<14x1xf32, #tpu.memory_space<vmem>>, vector<14x1xf32>
      tpu.vector_store %arg6[%c0_9, %c0_10], %15 {strides = array<i32>} : memref<14x1xf32, #tpu.memory_space<vmem>>, vector<14x1xf32>,
    } else {
    }
    %c1_i32_4 = arith.constant 1 : i32
    %9 = arith.cmpi sge, %arg1, %c1_i32_4 : i32
    %10 = arith.extui %9 : i1 to i32
    %c0_i32_5 = arith.constant 0 : i32
    %11 = arith.cmpi ne, %10, %c0_i32_5 : i32
    scf.if %11 {
      %c1_i32_6 = arith.constant 1 : i32
      %12 = arith.subi %arg1, %c1_i32_6 : i32
      %13 = arith.index_cast %12 : i32 to index
      %c0 = arith.constant 0 : index
      %c0_7 = arith.constant 0 : index
      %14 = vector.load %arg8[%13, %c0, %c0_7] : memref<1x14x500xf32, #tpu.memory_space<vmem>>, vector<1x14x500xf32>
      %15 = vector.shape_cast %14 : vector<1x14x500xf32> to vector<14x500xf32>
      %c0_8 = arith.constant 0 : index
      %c0_9 = arith.constant 0 : index
      %16 = vector.load %arg6[%c0_8, %c0_9] : memref<14x1xf32, #tpu.memory_space<vmem>>, vector<14x1xf32>
      %17 = vector.broadcast %16 : vector<14x1xf32> to vector<14x500xf32>
      %18 = arith.subf %15, %17 : vector<14x500xf32>
      %c0_10 = arith.constant 0 : index
      %c0_11 = arith.constant 0 : index
      %19 = vector.load %arg5[%c0_10, %c0_11] : memref<14x500xf32, #tpu.memory_space<vmem>>, vector<14x500xf32>
      tpu.vector_store %arg5[%c0_10, %c0_11], %18 {strides = array<i32>} : memref<14x500xf32, #tpu.memory_space<vmem>>, vector<14x500xf32>,
    } else {
    }
    return
  }
  func.func @transform_0(%arg0: i32, %arg1: i32) -> (i32, i32) {
    %c0_i32 = arith.constant 0 : i32
    %c0_i32_0 = arith.constant 0 : i32
    return %arg0, %c0_i32 : i32, i32
  }
  func.func @transform_1(%arg0: i32, %arg1: i32) -> (i32, i32) {
    %c0_i32 = arith.constant 0 : i32
    %0 = arith.minsi %arg1, %c0_i32 : i32
    %c0_i32_0 = arith.constant 0 : i32
    %c0_i32_1 = arith.constant 0 : i32
    return %c0_i32_0, %0 : i32, i32
  }
  func.func @transform_2(%arg0: i32, %arg1: i32) -> (i32, i32) {
    %c0_i32 = arith.constant 0 : i32
    %0 = arith.minsi %arg1, %c0_i32 : i32
    %c0_i32_0 = arith.constant 0 : i32
    %c0_i32_1 = arith.constant 0 : i32
    return %c0_i32_0, %0 : i32, i32
  }
  func.func @transform_3(%arg0: i32, %arg1: i32) -> (i32, i32) {
    %c1_i32 = arith.constant 1 : i32
    %0 = arith.subi %arg1, %c1_i32 : i32
    %c0_i32 = arith.constant 0 : i32
    %1 = arith.maxsi %0, %c0_i32 : i32
    %c0_i32_0 = arith.constant 0 : i32
    return %arg0, %1 : i32, i32
  }
}

</mosaic_0001>

<llo_original>
// kernel: projection_layer.1
$region0: #{projection_layer.1}
  #allocation0 [shape = 'u32[]', space=smem, size = 0x4, offset = 0x4, fixed_abs, tag = 'smem constant byte address 0x4 - core index']
  #allocation1 [shape = 'u32[144,128]{1,0:T(1,128)}', space=vmem, size = 0x12000, scoped, tag = 'internal scratch']
  #allocation2 [shape = 'f32[14,1]{1,0:T(8,128)}', space=vmem, size = 0x2000, scoped, tag = 'scratch operand']
  #allocation3 [shape = 'f32[14,1]{1,0:T(8,128)}', space=vmem, size = 0x2000, scoped, tag = 'scratch operand']
  #allocation4 [shape = 'f32[1,14,500]{2,1,0:T(8,128)}', space=vmem, size = 0x8000, scoped, tag = 'scratch operand']
  %s0 = inlined_call_operand.vmem [shape: f32[14,32], index: 0, kind: input, shape index: {}]
  %s1 = inlined_call_operand.hbm [shape: f32[32,500], index: 1, kind: input, shape index: {}]
  %s2 = inlined_call_operand.vmem [shape: f32[1,500], index: 2, kind: input, shape index: {}]
  %s3 = inlined_call_operand.vmem [shape: f32[14,500], index: 3, kind: output, shape index: {}]
  %s4 = sld [smem:[#allocation0]]
  $region65: #{projection_layer.1} parent=0
    _
  %s6 = ssub.s32 1, %s4
  %s7 = scalar_select 0, %s6, %s4
  $region1: #{projection_layer.1} parent=0
    #allocation5 [shape = 'u8[131072]{0}', space=vmem, size = 0x20000, scoped, tag = 'input window, operand 1']
    #allocation6 [shape = 's32[2]{0}', space=sflag, size = 0x8, scoped, tag = 'scoped memory for projection_layer.1']
    %8 = vsyncpa [#allocation6], 0
    %s9 = scalar_lea.sflag [#allocation6], 1
    %10 = vsyncpa %s9, 0
    loop: start=0, step=1, limit=4
    $region2: #{projection_layer.1} parent=1 // loop_pre_header
      _
    $region3: #{projection_layer.1} parent=1 // loop_header
      %s12 = sphi 0, %s16
      %p13 = scmp.ge.s32.totalorder %s12, 4
      %s19 = sphi 0, %s31
      %s20 = sphi 0, %s27
      %s21 = sphi 0, %s19
      %s22 = sphi 0, %s20
      %s23 = sphi 0, %s21
      %s24 = sphi 0, %s22
      %s34 = sphi 0, %s36
      %s37 = sphi 0, %s34
      %s38 = sphi 0, %s37
      %s54 = sphi 0, %s38
      %s64 = sphi 0, %s66
      %s67 = sphi 0, %s64
      %s68 = sphi 0, %s67
      %s84 = sphi 0, %s68
      %s94 = sphi 0, %s96
      %s97 = sphi 0, %s94
      %s98 = sphi 0, %s97
      %s114 = sphi 0, %s98
      %s128 = sphi 0, %s130
      %s131 = sphi 0, %s128
      %s132 = sphi 0, %s131
      %s148 = sphi 0, %s132
    $region4: #{projection_layer.1} parent=1 // loop_header_branch
      %15 = sbr.rel (%p13) target = $region8
    $region5: #{projection_layer.1} parent=1 // loop_body
      %s17 = ssub.s32 %s12, 1
      %s18 = ssub.s32 %s12, 2
      %s25 = sadd.s32 1, %s20
      %p26 = scmp.ge.s32.totalorder %s25, 2
      %s27 = scalar_select %p26, 0, %s25
      %s28 = sadd.s32 1, %s19
      %s29 = scalar_select %p26, %s28, %s19
      %p30 = scmp.ge.s32.totalorder %s29, 1
      %s31 = scalar_select %p30, 0, %s29
      %s32 = ssub.s32 %s19, %s31
      %p33 = scmp.eq.s32.totalorder %s32, 0
      %s35 = sadd.s32 %s34, 1
      %s36 = scalar_select %p33, %s34, %s35
      %p39 = pneg %p33
      %p40 = scmp.eq.s32.totalorder %s12, 1
      %p41 = por %p39, %p40
      %p42 = scmp.ne.s32.totalorder %s34, %s37
      %p43 = scmp.eq.s32.totalorder %s12, 0
      %p44 = por %p42, %p43
      %p45 = scmp.ne.s32.totalorder %s34, %s37
      %p46 = scmp.eq.s32.totalorder %s17, 1
      %p47 = por %p45, %p46
      %p48 = scmp.ne.s32.totalorder %s37, %s38
      %p49 = scmp.eq.s32.totalorder %s17, 0
      %p50 = por %p48, %p49
      %p51 = scmp.ne.s32.totalorder %s37, %s38
      %p52 = scmp.eq.s32.totalorder %s18, 1
      %p53 = por %p51, %p52
      %p55 = scmp.ne.s32.totalorder %s38, %s54
      %p56 = scmp.eq.s32.totalorder %s18, 0
      %p57 = por %p55, %p56
      %p58 = scmp.lt.s32.totalorder %s20, 0
      %s59 = scalar_select %p58, %s20, 0
      %p60 = scmp.lt.s32.totalorder %s27, 0
      %s61 = scalar_select %p60, %s27, 0
      %s62 = ssub.s32 %s59, %s61
      %p63 = scmp.eq.s32.totalorder %s62, 0
      %s65 = sadd.s32 %s64, 1
      %s66 = scalar_select %p63, %s64, %s65
      %p69 = pneg %p63
      %p70 = scmp.eq.s32.totalorder %s12, 1
      %p71 = por %p69, %p70
      %p72 = scmp.ne.s32.totalorder %s64, %s67
      %p73 = scmp.eq.s32.totalorder %s12, 0
      %p74 = por %p72, %p73
      %p75 = scmp.ne.s32.totalorder %s64, %s67
      %p76 = scmp.eq.s32.totalorder %s17, 1
      %p77 = por %p75, %p76
      %p78 = scmp.ne.s32.totalorder %s67, %s68
      %p79 = scmp.eq.s32.totalorder %s17, 0
      %p80 = por %p78, %p79
      %p81 = scmp.ne.s32.totalorder %s67, %s68
      %p82 = scmp.eq.s32.totalorder %s18, 1
      %p83 = por %p81, %p82
      %p85 = scmp.ne.s32.totalorder %s68, %s84
      %p86 = scmp.eq.s32.totalorder %s18, 0
      %p87 = por %p85, %p86
      %p88 = scmp.lt.s32.totalorder %s20, 0
      %s89 = scalar_select %p88, %s20, 0
      %p90 = scmp.lt.s32.totalorder %s27, 0
      %s91 = scalar_select %p90, %s27, 0
      %s92 = ssub.s32 %s89, %s91
      %p93 = scmp.eq.s32.totalorder %s92, 0
      %s95 = sadd.s32 %s94, 1
      %s96 = scalar_select %p93, %s94, %s95
      %p99 = pneg %p93
      %p100 = scmp.eq.s32.totalorder %s12, 1
      %p101 = por %p99, %p100
      %p102 = scmp.ne.s32.totalorder %s94, %s97
      %p103 = scmp.eq.s32.totalorder %s12, 0
      %p104 = por %p102, %p103
      %p105 = scmp.ne.s32.totalorder %s94, %s97
      %p106 = scmp.eq.s32.totalorder %s17, 1
      %p107 = por %p105, %p106
      %p108 = scmp.ne.s32.totalorder %s97, %s98
      %p109 = scmp.eq.s32.totalorder %s17, 0
      %p110 = por %p108, %p109
      %p111 = scmp.ne.s32.totalorder %s97, %s98
      %p112 = scmp.eq.s32.totalorder %s18, 1
      %p113 = por %p111, %p112
      %p115 = scmp.ne.s32.totalorder %s98, %s114
      %p116 = scmp.eq.s32.totalorder %s18, 0
      %p117 = por %p115, %p116
      %s118 = ssub.s32 %s20, 1
      %p119 = scmp.gt.s32.totalorder %s118, 0
      %s120 = scalar_select %p119, %s118, 0
      %s121 = ssub.s32 %s27, 1
      %p122 = scmp.gt.s32.totalorder %s121, 0
      %s123 = scalar_select %p122, %s121, 0
      %s124 = ssub.s32 %s19, %s31
      %s125 = ssub.s32 %s120, %s123
      %s126 = sor.u32 %s124, %s125
      %p127 = scmp.eq.s32.totalorder %s126, 0
      %s129 = sadd.s32 %s128, 1
      %s130 = scalar_select %p127, %s128, %s129
      %p133 = pneg %p127
      %p134 = scmp.eq.s32.totalorder %s12, 1
      %p135 = por %p133, %p134
      %p136 = scmp.ne.s32.totalorder %s128, %s131
      %p137 = scmp.eq.s32.totalorder %s12, 0
      %p138 = por %p136, %p137
      %p139 = scmp.ne.s32.totalorder %s128, %s131
      %p140 = scmp.eq.s32.totalorder %s17, 1
      %p141 = por %p139, %p140
      %p142 = scmp.ne.s32.totalorder %s131, %s132
      %p143 = scmp.eq.s32.totalorder %s17, 0
      %p144 = por %p142, %p143
      %p145 = scmp.ne.s32.totalorder %s131, %s132
      %p146 = scmp.eq.s32.totalorder %s18, 1
      %p147 = por %p145, %p146
      %p149 = scmp.ne.s32.totalorder %s132, %s148
      %p150 = scmp.eq.s32.totalorder %s18, 0
      %p151 = por %p149, %p150
      %p152 = scmp.le.s32.totalorder 1, %s12
      %p153 = scmp.lt.s32.totalorder %s12, 3
      %p154 = pnand %p152, %p153
      %p155 = pneg %p154
      // Predicated region
      $region9: #{projection_layer.1} parent=5 // pred_check
        _
      $region10: #{projection_layer.1} parent=5 // pred_check_branch
        %157 = sbr.rel (%p154) target = $region12
      $region11: #{projection_layer.1} parent=5 // pred_region
        %s158 = ssub.s32 %s12, 1
        // Predicated region
        $region13: #{projection_layer.1} parent=11 // pred_check
          %p159 = pneg %p50
        $region14: #{projection_layer.1} parent=11 // pred_check_branch
          %161 = sbr.rel (%p159) target = $region16
        $region15: #{projection_layer.1} parent=11 // pred_region
          %s162 = smul.u32 2, %s21
          %p163 = scmp.lt.s32.totalorder %s162, 1
          %s164 = scalar_select %p163, %s162, 1
          %s165 = smul.addr %s164, 8
          %s166 = scalar_lea.vmem %s0, %s165
          %s167 = smul.u32 2, %s21
        $region16: #{projection_layer.1} parent=11 // pred_fallthru
          _
      $region12: #{projection_layer.1} parent=5 // pred_fallthru
        _
      %p168 = scmp.lt.s32.totalorder %s12, 2
      // Predicated region
      $region17: #{projection_layer.1} parent=5 // pred_check
        %p169 = pneg %p168
      $region18: #{projection_layer.1} parent=5 // pred_check_branch
        %171 = sbr.rel (%p169) target = $region20
      $region19: #{projection_layer.1} parent=5 // pred_region
        // Predicated region
        $region21: #{projection_layer.1} parent=19 // pred_check
          %p172 = pneg %p74
        $region22: #{projection_layer.1} parent=19 // pred_check_branch
          %174 = sbr.rel (%p172) target = $region24
        $region23: #{projection_layer.1} parent=19 // pred_region
          %s175 = sand.u32 %s64, 1
          %s176 = scalar_lea.sflag [#allocation6], %s175
          %s177 = sand.u32 %s64, 1
          %s178 = smul.addr %s177, 128
          %s179 = scalar_lea.vmem [#allocation5], %s178
          %p180 = scmp.lt.s32.totalorder %s20, 0
          %s181 = scalar_select %p180, %s20, 0
          %s182 = smul.u32 4, %s181
          %s184 = ssub.s32 2048, 2048
          %185 = vsyncadd %s176, %s184
          %s186 = smul.addr %s182, 128
          %s187 = scalar_lea.hbm %s1, %s186
          %s188 = sshll.u32 %s179, 4
          %s189 = int_to_ptr.vmem [resolvable:$true] %s188
          %194 = dma.hbm_to_vmem [thread:$0]  %s187, 2048, %s189, %s176, 512, 512, 32
        $region24: #{projection_layer.1} parent=19 // pred_fallthru
          _
        // Predicated region
        $region25: #{projection_layer.1} parent=19 // pred_check
          %p195 = pneg %p104
        $region26: #{projection_layer.1} parent=19 // pred_check_branch
          %197 = sbr.rel (%p195) target = $region28
        $region27: #{projection_layer.1} parent=19 // pred_region
          %p198 = scmp.lt.s32.totalorder %s20, 0
          %s199 = scalar_select %p198, %s20, 0
          %s200 = smul.u32 4, %s199
          %p201 = scmp.lt.s32.totalorder %s200, 3
          %s202 = scalar_select %p201, %s200, 3
          %s203 = scalar_lea.vmem %s2, %s202
          %p204 = scmp.lt.s32.totalorder %s20, 0
          %s205 = scalar_select %p204, %s20, 0
          %s206 = smul.u32 4, %s205
        $region28: #{projection_layer.1} parent=19 // pred_fallthru
          _
      $region20: #{projection_layer.1} parent=5 // pred_fallthru
        _
      %p207 = scmp.le.s32.totalorder 1, %s12
      %p208 = scmp.lt.s32.totalorder %s12, 3
      %p209 = pnand %p207, %p208
      %p210 = pneg %p209
      // Predicated region
      $region29: #{projection_layer.1} parent=5 // pred_check
        _
      $region30: #{projection_layer.1} parent=5 // pred_check_branch
        %212 = sbr.rel (%p209) target = $region32
      $region31: #{projection_layer.1} parent=5 // pred_region
        %s213 = ssub.s32 %s12, 1
        %s214 = sand.u32 %s67, 1
        %s215 = scalar_lea.sflag [#allocation6], %s214
        %s216 = sand.u32 %s67, 1
        %s217 = smul.addr %s216, 128
        %s218 = scalar_lea.vmem [#allocation5], %s217
        // Predicated region
        $region33: #{projection_layer.1} parent=31 // pred_check
          %p219 = pneg %p80
        $region34: #{projection_layer.1} parent=31 // pred_check_branch
          %221 = sbr.rel (%p219) target = $region36
        $region35: #{projection_layer.1} parent=31 // pred_region
          %222 = dma.done %s215, 2048
        $region36: #{projection_layer.1} parent=31 // pred_fallthru
          _
        %s223 = smul.u32 2, %s21
        %p224 = scmp.lt.s32.totalorder %s223, 1
        %s225 = scalar_select %p224, %s223, 1
        %s226 = smul.addr %s225, 8
        %s227 = scalar_lea.vmem %s0, %s226
        %p228 = pneg %p50
        %p229 = pneg %p47
        %s230 = sand.u32 %s67, 1
        %s231 = scalar_lea.sflag [#allocation6], %s230
        %s232 = sand.u32 %s67, 1
        %s233 = smul.addr %s232, 128
        %s234 = scalar_lea.vmem [#allocation5], %s233
        %p235 = pneg %p80
        %p236 = pneg %p77
        %p237 = scmp.lt.s32.totalorder %s22, 0
        %s238 = scalar_select %p237, %s22, 0
        %s239 = smul.u32 4, %s238
        %p240 = scmp.lt.s32.totalorder %s239, 3
        %s241 = scalar_select %p240, %s239, 3
        %s242 = scalar_lea.vmem %s2, %s241
        %p243 = pneg %p110
        %p244 = pneg %p107
        %p245 = pneg %p144
        %p246 = pneg %p141
        %s247 = ssub.s32 %s22, 1
        %p248 = scmp.gt.s32.totalorder %s247, 0
        %s249 = scalar_select %p248, %s247, 0
        %s250 = smul.u32 2, %s21
        %s251 = smul.u32 4, %s249
        %p252 = scmp.lt.s32.totalorder %s250, 1
        %s253 = scalar_select %p252, %s250, 1
        %p254 = scmp.lt.s32.totalorder %s251, 3
        %s255 = scalar_select %p254, %s251, 3
        %s256 = smul.addr %s253, 4
        %s257 = sadd.s32 %s255, %s256
        %s258 = smul.addr %s257, 8
        %s259 = scalar_lea.vmem %s3, %s258
        %s260 = smul.u32 2, %s21
        %p261 = scmp.lt.s32.totalorder %s260, 1
        %s262 = scalar_select %p261, %s260, 1
        %s263 = smul.addr %s262, 8
        %s264 = scalar_lea.vmem %s0, %s263
        %s265 = smul.u32 2, %s21
        %p266 = scmp.lt.s32.totalorder %s22, 0
        %s267 = scalar_select %p266, %s22, 0
        %s268 = smul.u32 4, %s267
        %p269 = scmp.lt.s32.totalorder %s22, 0
        %s270 = scalar_select %p269, %s22, 0
        %s271 = smul.u32 4, %s270
        %p272 = scmp.lt.s32.totalorder %s271, 3
        %s273 = scalar_select %p272, %s271, 3
        %s274 = scalar_lea.vmem %s2, %s273
        %p275 = scmp.lt.s32.totalorder %s22, 0
        %s276 = scalar_select %p275, %s22, 0
        %s277 = smul.u32 4, %s276
        %s278 = ssub.s32 %s22, 1
        %p279 = scmp.gt.s32.totalorder %s278, 0
        %s280 = scalar_select %p279, %s278, 0
        %s281 = smul.u32 2, %s21
        %s282 = smul.u32 4, %s280
        %p283 = scmp.lt.s32.totalorder %s281, 1
        %s284 = scalar_select %p283, %s281, 1
        %p285 = scmp.lt.s32.totalorder %s282, 3
        %s286 = scalar_select %p285, %s282, 3
        %s287 = smul.addr %s284, 4
        %s288 = sadd.s32 %s286, %s287
        %s289 = smul.addr %s288, 8
        %s290 = scalar_lea.vmem %s3, %s289
        %s291 = ssub.s32 %s22, 1
        %p292 = scmp.gt.s32.totalorder %s291, 0
        %s293 = scalar_select %p292, %s291, 0
        %s294 = smul.u32 2, %s21
        %s295 = smul.u32 4, %s293
        %p296 = scmp.eq.s32.totalorder %s22, 0
        // Predicated region
        $region37: #{projection_layer.1} parent=31 // pred_check
          %p297 = pneg %p296
        $region38: #{projection_layer.1} parent=31 // pred_check_branch
          %299 = sbr.rel (%p297) target = $region40
        $region39: #{projection_layer.1} parent=31 // pred_region
          %vm300 = vcmask 7168
          %301 = vst.msk [vmem:[#allocation2] sm:$0xff] %vm300, -inf
          %vm302 = vcmask 5120
          %303 = vst.msk [vmem:[#allocation2 + $0x8] sm:$0x3f] %vm302, -inf
          %304 = vst.msk [vmem:[#allocation3] sm:$0xff] %vm300, 0.0
          %305 = vst.msk [vmem:[#allocation3 + $0x8] sm:$0x3f] %vm302, 0.0
        $region40: #{projection_layer.1} parent=31 // pred_fallthru
          _
        %p306 = scmp.lt.s32.totalorder %s22, 1
        // Predicated region
        $region41: #{projection_layer.1} parent=31 // pred_check
          %p307 = pneg %p306
        $region42: #{projection_layer.1} parent=31 // pred_check_branch
          %309 = sbr.rel (%p307) target = $region44
        $region43: #{projection_layer.1} parent=31 // pred_region
          %v310 = vld [vmem:[%s264] sm:$0xff]
          %v311 = vld [vmem:[%s264 + $0x8] sm:$0x3f]
          %v312 = vld [vmem:[%s218] sm:$0xff]
          %v313 = vld [vmem:[%s218 + $0x8] sm:$0xff]
          %v314 = vld [vmem:[%s218 + $0x10] sm:$0xff]
          %v315 = vld [vmem:[%s218 + $0x18] sm:$0xff]
          %v316 = vld [vmem:[%s218 + $0x20] sm:$0xff]
          %v317 = vld [vmem:[%s218 + $0x28] sm:$0xff]
          %v318 = vld [vmem:[%s218 + $0x30] sm:$0xff]
          %v319 = vld [vmem:[%s218 + $0x38] sm:$0xff]
          %v320 = vld [vmem:[%s218 + $0x40] sm:$0xff]
          %v321 = vld [vmem:[%s218 + $0x48] sm:$0xff]
          %v322 = vld [vmem:[%s218 + $0x50] sm:$0xff]
          %v323 = vld [vmem:[%s218 + $0x58] sm:$0xff]
          %v324 = vld [vmem:[%s218 + $0x60] sm:$0xff]
          %v325 = vld [vmem:[%s218 + $0x68] sm:$0xff]
          %v326 = vld [vmem:[%s218 + $0x70] sm:$0xff]
          %v327 = vld [vmem:[%s218 + $0x78] sm:$0xff]
          %v328 = vld [vmem:[%s274] sm:$0xf]
          %v330 = vlaneseq
          %v331 = vshrl.u32 %v330, 7
          %v332 = vsub.s32 0, %v331
          %v333 = vrot.slane %v328, %v332
          %v334 = vlaneseq
          %v335 = vshrl.u32 %v334, 7
          %v336 = vsub.s32 1, %v335
          %v337 = vrot.slane %v328, %v336
          %v338 = vlaneseq
          %v339 = vshrl.u32 %v338, 7
          %v340 = vsub.s32 2, %v339
          %v341 = vrot.slane %v328, %v340
          %v342 = vlaneseq
          %v343 = vshrl.u32 %v342, 7
          %v344 = vsub.s32 3, %v343
          %v345 = vrot.slane %v328, %v344
          %vm350 = vcmask 261120
          %v352 = vsel %vm350, %v310, 0
          %v355 = vsel %vm350, %v311, 0
          %357 = vmatprep.subr.mxu0 %v313
          %358 = vmatpush1.msra.mxu0 %v312
          %359 = vmatprep.subr.mxu0 %v317
          %360 = vmatpush1.msra.mxu0 %v316
          %361 = vmatprep.subr.mxu0 %v321
          %362 = vmatpush1.msra.mxu0 %v320
          %363 = vmatprep.subr.mxu0 %v325
          %364 = vmatpush1.msra.mxu0 %v324
          %365 = vmatprep.subr.mxu0 0.0
          %366 = vmatpush1.msra.mxu0 0.0
          %367 = vmatprep.subr.mxu0 0.0
          %368 = vmatpush1.msra.mxu0 0.0
          %369 = vmatprep.subr.mxu0 0.0
          %370 = vmatpush1.msra.mxu0 0.0
          %371 = vmatprep.subr.mxu0 0.0
          %372 = vmatpush1.msra.mxu0 0.0
          %373 = vmatprep.subr.mxu0 0.0
          %374 = vmatpush1.msra.mxu0 0.0
          %375 = vmatprep.subr.mxu0 0.0
          %376 = vmatpush1.msra.mxu0 0.0
          %377 = vmatprep.subr.mxu0 0.0
          %378 = vmatpush1.msra.mxu0 0.0
          %379 = vmatprep.subr.mxu0 0.0
          %380 = vmatpush1.msra.mxu0 0.0
          %381 = vmatprep.subr.mxu0 0.0
          %382 = vmatpush1.msra.mxu0 0.0
          %383 = vmatprep.subr.mxu0 0.0
          %384 = vmatpush1.msra.mxu0 0.0
          %385 = vmatprep.subr.mxu0 0.0
          %386 = vmatpush1.msra.mxu0 0.0
          %387 = vmatprep.subr.mxu0 0.0
          %388 = vmatpush1.msra.mxu0 0.0
          %389 = vmatprep.subr.mxu0 0.0
          %390 = vmatpush1.msra.mxu0 0.0
          %391 = vmatprep.subr.mxu0 0.0
          %392 = vmatpush1.msra.mxu0 0.0
          %393 = vmatprep.subr.mxu0 0.0
          %394 = vmatpush1.msra.mxu0 0.0
          %395 = vmatprep.subr.mxu0 0.0
          %396 = vmatpush1.msra.mxu0 0.0
          %397 = vmatprep.subr.mxu0 0.0
          %398 = vmatpush1.msra.mxu0 0.0
          %399 = vmatprep.subr.mxu0 0.0
          %400 = vmatpush1.msra.mxu0 0.0
          %401 = vmatprep.subr.mxu0 0.0
          %402 = vmatpush1.msra.mxu0 0.0
          %403 = vmatprep.subr.mxu0 0.0
          %404 = vmatpush1.msra.mxu0 0.0
          %405 = vmatprep.subr.mxu0 0.0
          %406 = vmatpush1.msra.mxu0 0.0
          %407 = vmatprep.subr.mxu0 0.0
          %408 = vmatpush1.msra.mxu0 0.0
          %409 = vmatprep.subr.mxu0 0.0
          %410 = vmatpush1.msra.mxu0 0.0
          %411 = vmatprep.subr.mxu0 0.0
          %412 = vmatpush1.msra.mxu0 0.0
          %413 = vmatprep.subr.mxu0 0.0
          %414 = vmatpush1.msra.mxu0 0.0
          %415 = vmatprep.subr.mxu0 0.0
          %416 = vmatpush1.msra.mxu0 0.0
          %417 = vmatprep.subr.mxu0 0.0
          %418 = vmatpush1.msra.mxu0 0.0
          %419 = vmatprep.subr.mxu0 0.0
          %420 = vmatpush1.msra.mxu0 0.0
          %421 = vmatprep.mubr.f32.mxu0 0.0
          %422 = vmatmul.mubr.f32.gmra.mrb[0].mxu0 %v352
          %v423 = vpop.f32.mrb[0].mxu0
          %v424 = vadd.f32 %v333, %v423
          %v425 = vpop.f32.mrb[0].mxu0
          %v426 = vadd.f32 %v337, %v425
          %427 = vmatprep.mubr.f32.mxu0 0.0
          %428 = vmatmul.mubr.f32.gmra.mrb[0].mxu0 %v355
          %v429 = vpop.f32.mrb[0].mxu0
          %v430 = vadd.f32 %v333, %v429
          %v431 = vpop.f32.mrb[0].mxu0
          %v432 = vadd.f32 %v337, %v431
          %433 = vdwg.mxu0
          %434 = vmatprep.subr.mxu0 %v315
          %435 = vmatpush1.msra.mxu0 %v314
          %436 = vmatprep.subr.mxu0 %v319
          %437 = vmatpush1.msra.mxu0 %v318
          %438 = vmatprep.subr.mxu0 %v323
          %439 = vmatpush1.msra.mxu0 %v322
          %440 = vmatprep.subr.mxu0 %v327
          %441 = vmatpush1.msra.mxu0 %v326
          %442 = vmatprep.subr.mxu0 0.0
          %443 = vmatpush1.msra.mxu0 0.0
          %444 = vmatprep.subr.mxu0 0.0
          %445 = vmatpush1.msra.mxu0 0.0
          %446 = vmatprep.subr.mxu0 0.0
          %447 = vmatpush1.msra.mxu0 0.0
          %448 = vmatprep.subr.mxu0 0.0
          %449 = vmatpush1.msra.mxu0 0.0
          %450 = vmatprep.subr.mxu0 0.0
          %451 = vmatpush1.msra.mxu0 0.0
          %452 = vmatprep.subr.mxu0 0.0
          %453 = vmatpush1.msra.mxu0 0.0
          %454 = vmatprep.subr.mxu0 0.0
          %455 = vmatpush1.msra.mxu0 0.0
          %456 = vmatprep.subr.mxu0 0.0
          %457 = vmatpush1.msra.mxu0 0.0
          %458 = vmatprep.subr.mxu0 0.0
          %459 = vmatpush1.msra.mxu0 0.0
          %460 = vmatprep.subr.mxu0 0.0
          %461 = vmatpush1.msra.mxu0 0.0
          %462 = vmatprep.subr.mxu0 0.0
          %463 = vmatpush1.msra.mxu0 0.0
          %464 = vmatprep.subr.mxu0 0.0
          %465 = vmatpush1.msra.mxu0 0.0
          %466 = vmatprep.subr.mxu0 0.0
          %467 = vmatpush1.msra.mxu0 0.0
          %468 = vmatprep.subr.mxu0 0.0
          %469 = vmatpush1.msra.mxu0 0.0
          %470 = vmatprep.subr.mxu0 0.0
          %471 = vmatpush1.msra.mxu0 0.0
          %472 = vmatprep.subr.mxu0 0.0
          %473 = vmatpush1.msra.mxu0 0.0
          %474 = vmatprep.subr.mxu0 0.0
          %475 = vmatpush1.msra.mxu0 0.0
          %476 = vmatprep.subr.mxu0 0.0
          %477 = vmatpush1.msra.mxu0 0.0
          %478 = vmatprep.subr.mxu0 0.0
          %479 = vmatpush1.msra.mxu0 0.0
          %480 = vmatprep.subr.mxu0 0.0
          %481 = vmatpush1.msra.mxu0 0.0
          %482 = vmatprep.subr.mxu0 0.0
          %483 = vmatpush1.msra.mxu0 0.0
          %484 = vmatprep.subr.mxu0 0.0
          %485 = vmatpush1.msra.mxu0 0.0
          %486 = vmatprep.subr.mxu0 0.0
          %487 = vmatpush1.msra.mxu0 0.0
          %488 = vmatprep.subr.mxu0 0.0
          %489 = vmatpush1.msra.mxu0 0.0
          %490 = vmatprep.subr.mxu0 0.0
          %491 = vmatpush1.msra.mxu0 0.0
          %492 = vmatprep.subr.mxu0 0.0
          %493 = vmatpush1.msra.mxu0 0.0
          %494 = vmatprep.subr.mxu0 0.0
          %495 = vmatpush1.msra.mxu0 0.0
          %496 = vmatprep.subr.mxu0 0.0
          %497 = vmatpush1.msra.mxu0 0.0
          %498 = vmatprep.mubr.f32.mxu0 0.0
          %499 = vmatmul.mubr.f32.gmra.mrb[0].mxu0 %v352
          %v500 = vpop.f32.mrb[0].mxu0
          %v501 = vadd.f32 %v341, %v500
          %v502 = vpop.f32.mrb[0].mxu0
          %v503 = vadd.f32 %v345, %v502
          %504 = vmatprep.mubr.f32.mxu0 0.0
          %505 = vmatmul.mubr.f32.gmra.mrb[0].mxu0 %v355
          %v506 = vpop.f32.mrb[0].mxu0
          %v507 = vadd.f32 %v341, %v506
          %v508 = vpop.f32.mrb[0].mxu0
          %v509 = vadd.f32 %v345, %v508
          %510 = vdwg.mxu0
          %s511 = smul.u32 %s22, 8
          %s512 = smul.addr %s511, 8
          %s513 = scalar_lea.vmem [#allocation4], %s512
          %514 = vst [vmem:[%s513] sm:$0xff] %v424
          %515 = vst [vmem:[%s513 + $0x8] sm:$0xff] %v426
          %516 = vst [vmem:[%s513 + $0x10] sm:$0xff] %v501
          %vm517 = vcmask 949248
          %518 = vst.msk [vmem:[%s513 + $0x18] sm:$0xff] %vm517, %v503
          %519 = vst [vmem:[%s513 + $0x20] sm:$0x3f] %v430
          %520 = vst [vmem:[%s513 + $0x28] sm:$0x3f] %v432
          %521 = vst [vmem:[%s513 + $0x30] sm:$0x3f] %v507
          %vm522 = vcmask 947200
          %523 = vst.msk [vmem:[%s513 + $0x38] sm:$0x3f] %vm522, %v509
          %v524 = vld [vmem:[#allocation2] sm:$0xff]
          %v525 = vld [vmem:[#allocation2 + $0x8] sm:$0x3f]
          %v526 = vmax.f32 %v424, %v501
          %v527 = vsel %vm517, %v503, -inf
          %v528 = vmax.f32 %v426, %v527
          %v529 = vmax.f32 %v526, %v528
          %530 = vmax.xlane.f32.xlu0 %v529
          %v531 = vpop.xlane.xlu0 %530
          %vm532 = vcmask 1045504
          %v533 = vsel %vm532, %v430, -inf
          %v534 = vsel %vm532, %v432, -inf
          %v535 = vsel %vm532, %v507, -inf
          %v536 = vmax.f32 %v533, %v535
          %v537 = vsel %vm522, %v509, -inf
          %v538 = vmax.f32 %v534, %v537
          %v539 = vmax.f32 %v536, %v538
          %540 = vmax.xlane.f32.xlu0 %v539
          %v541 = vpop.xlane.xlu0 %540
          %v542 = vmax.f32 %v524, %v531
          %v543 = vmax.f32 %v525, %v541
          %v544 = vld [vmem:[#allocation3] sm:$0xff]
          %v545 = vld [vmem:[#allocation3 + $0x8] sm:$0x3f]
          %v546 = vsub.f32 %v524, %v542
          %v547 = vsub.f32 %v525, %v543
          %v548 = vmul.f32 %v546, 1.442695
          %v549 = vpow.pop %v548
          %v550 = vmul.f32 %v547, 1.442695
          %v551 = vpow.pop %v550
          %v552 = vmul.f32 %v544, %v549
          %v553 = vmul.f32 %v545, %v551
          %555 = vset.pattern.permute.xlu0 0
          %556 = vperm.xlu0 %555, %v542
          %v557 = vpop.permute.xlu0 %556
          %560 = vset.pattern.permute.xlu0 0
          %561 = vperm.xlu0 %560, %v543
          %v562 = vpop.permute.xlu0 %561
          %v564 = vsub.f32 %v424, %v557
          %v565 = vsub.f32 %v426, %v557
          %v566 = vsub.f32 %v501, %v557
          %v567 = vsub.f32 %v503, %v557
          %v568 = vsub.f32 %v430, %v562
          %v569 = vsub.f32 %v432, %v562
          %v570 = vsub.f32 %v507, %v562
          %v571 = vsub.f32 %v509, %v562
          %v572 = vmul.f32 %v564, 1.442695
          %v573 = vpow.pop %v572
          %v574 = vmul.f32 %v565, 1.442695
          %v575 = vpow.pop %v574
          %v576 = vmul.f32 %v566, 1.442695
          %v577 = vpow.pop %v576
          %v578 = vmul.f32 %v567, 1.442695
          %v579 = vpow.pop %v578
          %v580 = vmul.f32 %v568, 1.442695
          %v581 = vpow.pop %v580
          %v582 = vmul.f32 %v569, 1.442695
          %v583 = vpow.pop %v582
          %v584 = vmul.f32 %v570, 1.442695
          %v585 = vpow.pop %v584
          %v586 = vmul.f32 %v571, 1.442695
          %v587 = vpow.pop %v586
          %v588 = vadd.f32 %v573, %v575
          %v589 = vadd.f32 %v588, %v577
          %v590 = vsel %vm517, %v579, 0.0
          %v591 = vadd.f32 %v589, %v590
          %592 = vadd.xlane.f32.xlu0 %v591
          %v593 = vpop.xlane.xlu0 %592
          %v594 = vsel %vm532, %v581, 0.0
          %v595 = vsel %vm532, %v583, 0.0
          %v596 = vadd.f32 %v594, %v595
          %v597 = vsel %vm532, %v585, 0.0
          %v598 = vadd.f32 %v596, %v597
          %v599 = vsel %vm522, %v587, 0.0
          %v600 = vadd.f32 %v598, %v599
          %601 = vadd.xlane.f32.xlu0 %v600
          %v602 = vpop.xlane.xlu0 %601
          %v603 = vadd.f32 %v552, %v593
          %v604 = vadd.f32 %v553, %v602
          %vm605 = vcmask 7168
          %606 = vst.msk [vmem:[#allocation3] sm:$0xff] %vm605, %v603
          %vm607 = vcmask 5120
          %608 = vst.msk [vmem:[#allocation3 + $0x8] sm:$0x3f] %vm607, %v604
          %609 = vst.msk [vmem:[#allocation2] sm:$0xff] %vm605, %v542
          %610 = vst.msk [vmem:[#allocation2 + $0x8] sm:$0x3f] %vm607, %v543
        $region44: #{projection_layer.1} parent=31 // pred_fallthru
          _
        %p611 = scmp.eq.s32.totalorder %s22, 1
        // Predicated region
        $region45: #{projection_layer.1} parent=31 // pred_check
          %p612 = pneg %p611
        $region46: #{projection_layer.1} parent=31 // pred_check_branch
          %614 = sbr.rel (%p612) target = $region48
        $region47: #{projection_layer.1} parent=31 // pred_region
          %v615 = vld [vmem:[#allocation2] sm:$0xff]
          %v616 = vld [vmem:[#allocation2 + $0x8] sm:$0x3f]
          %v617 = vld [vmem:[#allocation3] sm:$0xff]
          %v618 = vld [vmem:[#allocation3 + $0x8] sm:$0x3f]
          %v619 = vlog2.pop %v617
          %v620 = vmul.f32 %v619, 0.6931472
          %v621 = vlog2.pop %v618
          %v622 = vmul.f32 %v621, 0.6931472
          %v623 = vadd.f32 %v615, %v620
          %v624 = vadd.f32 %v616, %v622
          %vm625 = vcmask 7168
          %626 = vst.msk [vmem:[#allocation2] sm:$0xff] %vm625, %v623
          %vm627 = vcmask 5120
          %628 = vst.msk [vmem:[#allocation2 + $0x8] sm:$0x3f] %vm627, %v624
        $region48: #{projection_layer.1} parent=31 // pred_fallthru
          _
        %p629 = scmp.ge.s32.totalorder %s22, 1
        // Predicated region
        $region49: #{projection_layer.1} parent=31 // pred_check
          %p630 = pneg %p629
        $region50: #{projection_layer.1} parent=31 // pred_check_branch
          %632 = sbr.rel (%p630) target = $region52
        $region51: #{projection_layer.1} parent=31 // pred_region
          %s633 = ssub.s32 %s22, 1
          %s634 = smul.u32 %s633, 8
          %s635 = smul.addr %s634, 8
          %s636 = scalar_lea.vmem [#allocation4], %s635
          %v637 = vld [vmem:[%s636] sm:$0xff]
          %v638 = vld [vmem:[%s636 + $0x8] sm:$0xff]
          %v639 = vld [vmem:[%s636 + $0x10] sm:$0xff]
          %v640 = vld [vmem:[%s636 + $0x18] sm:$0xff]
          %v641 = vld [vmem:[%s636 + $0x20] sm:$0x3f]
          %v642 = vld [vmem:[%s636 + $0x28] sm:$0x3f]
          %v643 = vld [vmem:[%s636 + $0x30] sm:$0x3f]
          %v644 = vld [vmem:[%s636 + $0x38] sm:$0x3f]
          %v645 = vld [vmem:[#allocation2] sm:$0xff]
          %v646 = vld [vmem:[#allocation2 + $0x8] sm:$0x3f]
          %648 = vset.pattern.permute.xlu0 0
          %649 = vperm.xlu0 %648, %v645
          %v650 = vpop.permute.xlu0 %649
          %653 = vset.pattern.permute.xlu0 0
          %654 = vperm.xlu0 %653, %v646
          %v655 = vpop.permute.xlu0 %654
          %v657 = vsub.f32 %v637, %v650
          %v658 = vsub.f32 %v638, %v650
          %v659 = vsub.f32 %v639, %v650
          %v660 = vsub.f32 %v640, %v650
          %v661 = vsub.f32 %v641, %v655
          %v662 = vsub.f32 %v642, %v655
          %v663 = vsub.f32 %v643, %v655
          %v664 = vsub.f32 %v644, %v655
          %665 = vst [vmem:[%s290] sm:$0xff] %v657
          %666 = vst [vmem:[%s290 + $0x8] sm:$0xff] %v658
          %667 = vst [vmem:[%s290 + $0x10] sm:$0xff] %v659
          %vm668 = vcmask 949248
          %669 = vst.msk [vmem:[%s290 + $0x18] sm:$0xff] %vm668, %v660
          %670 = vst [vmem:[%s290 + $0x20] sm:$0x3f] %v661
          %671 = vst [vmem:[%s290 + $0x28] sm:$0x3f] %v662
          %672 = vst [vmem:[%s290 + $0x30] sm:$0x3f] %v663
          %vm673 = vcmask 947200
          %674 = vst.msk [vmem:[%s290 + $0x38] sm:$0x3f] %vm673, %v664
        $region52: #{projection_layer.1} parent=31 // pred_fallthru
          _
        %s675 = ssub.s32 %s22, 1
        %p676 = scmp.gt.s32.totalorder %s675, 0
        %s677 = scalar_select %p676, %s675, 0
        %s678 = smul.u32 2, %s21
        %s679 = smul.u32 4, %s677
        %p680 = scmp.lt.s32.totalorder %s678, 1
        %s681 = scalar_select %p680, %s678, 1
        %p682 = scmp.lt.s32.totalorder %s679, 3
        %s683 = scalar_select %p682, %s679, 3
        %s684 = smul.addr %s681, 4
        %s685 = sadd.s32 %s683, %s684
        %s686 = smul.addr %s685, 8
        %s687 = scalar_lea.vmem %s3, %s686
        // Predicated region
        $region53: #{projection_layer.1} parent=31 // pred_check
          %p688 = pneg %p141
        $region54: #{projection_layer.1} parent=31 // pred_check_branch
          %690 = sbr.rel (%p688) target = $region56
        $region55: #{projection_layer.1} parent=31 // pred_region
          %s691 = ssub.s32 %s22, 1
          %p692 = scmp.gt.s32.totalorder %s691, 0
          %s693 = scalar_select %p692, %s691, 0
          %s694 = smul.u32 2, %s21
          %s695 = smul.u32 4, %s693
        $region56: #{projection_layer.1} parent=31 // pred_fallthru
          _
      $region32: #{projection_layer.1} parent=5 // pred_fallthru
        _
      %p696 = scmp.le.s32.totalorder 2, %s12
      // Predicated region
      $region57: #{projection_layer.1} parent=5 // pred_check
        %p697 = pneg %p696
      $region58: #{projection_layer.1} parent=5 // pred_check_branch
        %699 = sbr.rel (%p697) target = $region60
      $region59: #{projection_layer.1} parent=5 // pred_region
        %s700 = ssub.s32 %s12, 2
        // Predicated region
        $region61: #{projection_layer.1} parent=59 // pred_check
          %p701 = pneg %p147
        $region62: #{projection_layer.1} parent=59 // pred_check_branch
          %703 = sbr.rel (%p701) target = $region64
        $region63: #{projection_layer.1} parent=59 // pred_region
          %s704 = ssub.s32 %s24, 1
          %p705 = scmp.gt.s32.totalorder %s704, 0
          %s706 = scalar_select %p705, %s704, 0
          %s707 = smul.u32 2, %s23
          %s708 = smul.u32 4, %s706
          %p709 = scmp.lt.s32.totalorder %s707, 1
          %s710 = scalar_select %p709, %s707, 1
          %p711 = scmp.lt.s32.totalorder %s708, 3
          %s712 = scalar_select %p711, %s708, 3
          %s713 = smul.addr %s710, 4
          %s714 = sadd.s32 %s712, %s713
          %s715 = smul.addr %s714, 8
          %s716 = scalar_lea.vmem %s3, %s715
        $region64: #{projection_layer.1} parent=59 // pred_fallthru
          _
      $region60: #{projection_layer.1} parent=5 // pred_fallthru
        _
    $region6: #{projection_layer.1} parent=1 // loop_footer
      %s16 = sadd.s32 1, %s12
    $region7: #{projection_layer.1} parent=1 // loop_footer_branch
      %11 = sbr.rel target = $region3
    $region8: #{projection_layer.1} parent=1 // loop_exit
      _
    %717 = vsyncpa [#allocation6], 1
    %s718 = scalar_lea.sflag [#allocation6], 1
    %719 = vsyncpa %s718, 1

</llo_original>
